<compile_context>
chip_gen: v7x
topology: tpu7x:2x2x1
jax: 0.10.0
libtpu: 0.0.40
codegen_flags: <defaults>
</compile_context>

<pallas_src>
import jax
import jax.numpy as jnp
from jax.experimental import pallas as pl
from jax.experimental.pallas import tpu as pltpu


def _round_up(n, m):
    return (n + m - 1) // m * m


def _affine_bias_smem_kernel(x_ref, w_ref, b_ref, o_ref):
    # Fused affine layer, scalar bias from SMEM (n_output == 1).
    acc = jnp.dot(x_ref[...], w_ref[...], preferred_element_type=jnp.float32)
    o_ref[...] = (acc + b_ref[0]).astype(o_ref.dtype)


def _affine_bias_vmem_kernel(x_ref, w_ref, b_ref, o_ref):
    # Generic fallback for n_output > 1: bias as a resident (1, n_output) VMEM row.
    acc = jnp.dot(x_ref[...], w_ref[...], preferred_element_type=jnp.float32)
    o_ref[...] = (acc + b_ref[...]).astype(o_ref.dtype)


def _rank_net_pallas(x, w_eff, b_eff_row, *, block_batch=4096):
    """x: (B, n_input) f32; w_eff: (n_input, n_output); b_eff_row: (1, n_output)."""
    batch, n_input = x.shape
    n_output = w_eff.shape[1]

    # Batch tile: sublane-aligned.  Big tiles amortize per-grid-step overhead;
    # tiny batches get a single (rounded-up-to-8) tile whose boundary rows are
    # clipped by Pallas on writeback.
    if batch >= block_batch:
        tm = block_batch
    else:
        tm = _round_up(max(batch, 1), 8)
    grid = (pl.cdiv(batch, tm),)

    # Scoped-VMEM budget: x and out blocks are lane-padded to 128 lanes and
    # double-buffered.  Cap well under v7x's 64 MiB physical VMEM.
    lanes_in = _round_up(max(n_input, 1), 128)
    lanes_out = _round_up(max(n_output, 1), 128)
    per_step = tm * (lanes_in + lanes_out) * 4
    vmem_limit = int(min(48 * 1024 * 1024,
                         max(16 * 1024 * 1024, 2 * per_step + (2 << 20))))

    in_specs = [
        # Activations: one batch tile per grid step (streamed, double-buffered).
        pl.BlockSpec((tm, n_input), lambda i: (i, 0)),
        # Fused weight: constant block index -> DMA'd once, VMEM-resident.
        pl.BlockSpec((n_input, n_output), lambda i: (0, 0)),
    ]

    if n_output == 1:
        kernel = _affine_bias_smem_kernel
        bias_arg = b_eff_row.reshape((1,))
        in_specs.append(pl.BlockSpec(memory_space=pltpu.MemorySpace.SMEM))
    else:
        kernel = _affine_bias_vmem_kernel
        bias_arg = b_eff_row
        in_specs.append(pl.BlockSpec((1, n_output), lambda i: (0, 0)))

    return pl.pallas_call(
        kernel,
        out_shape=jax.ShapeDtypeStruct((batch, n_output), jnp.float32),
        grid=grid,
        in_specs=in_specs,
        out_specs=pl.BlockSpec((tm, n_output), lambda i: (i, 0)),
        compiler_params=pltpu.CompilerParams(
            dimension_semantics=("parallel",),
            vmem_limit_bytes=vmem_limit,
        ),
    )(x, w_eff, bias_arg)


def _fuse_params(params):
    # y = (x @ W0 + b0) @ W1 + b1 == x @ W_eff + b_eff (no nonlinearity).
    (w0, b0), (w1, b1) = params
    w_eff = jnp.asarray(w0 @ w1, jnp.float32)                       # (n_input, n_output)
    b_eff = jnp.asarray(b0 @ w1 + b1, jnp.float32).reshape(1, -1)   # (1, n_output)
    return w_eff, b_eff


def make_rank_net_forward(params, *, block_batch=4096):
    """Precompute the fused affine map once; return a jitted forward(x)."""
    w_eff, b_eff = _fuse_params(params)

    @jax.jit
    def forward(x):
        return _rank_net_pallas(x, w_eff, b_eff, block_batch=block_batch)

    return forward


def rank_net_forward(x, params, *, block_batch=4096):
    """Convenience one-shot API (fuses params per call)."""
    w_eff, b_eff = _fuse_params(params)
    return _rank_net_pallas(x, w_eff, b_eff, block_batch=block_batch)


def init_params(key, n_input=5, n_output=1, n_hidden=12):
    """Deterministic init mimicking PyTorch nn.Linear default (U(+-1/sqrt(fan_in)))."""
    dims = [(n_input, n_hidden), (n_hidden, n_output)]
    params = []
    for fan_in, fan_out in dims:
        key, kw, kb = jax.random.split(key, 3)
        bound = 1.0 / jnp.sqrt(float(fan_in))
        w = jax.random.uniform(kw, (fan_in, fan_out), jnp.float32, -bound, bound)
        b = jax.random.uniform(kb, (fan_out,), jnp.float32, -bound, bound)
        params.append((w, b))
    return params


def reference_forward(x, params):
    # Unfused two-layer reference: linear_start then linear_end.
    h = x
    for w, b in params:
        h = h @ w + b
    return h


if __name__ == "__main__":
    key = jax.random.PRNGKey(0)
    key, kx1, kx2 = jax.random.split(key, 3)

    n_input, n_output, n_hidden = 5, 1, 12
    params = init_params(key, n_input, n_output, n_hidden)
    forward = make_rank_net_forward(params)

    # Sublane-aligned batch.
    x1 = jax.random.normal(kx1, (8, n_input), jnp.float32)
    y1 = jax.block_until_ready(forward(x1))
    y1_ref = reference_forward(x1, params)
    assert y1.shape == (8, n_output), y1.shape
    assert jnp.allclose(y1, y1_ref, atol=1e-5, rtol=1e-5), (y1, y1_ref)

    # Non-multiple-of-8 batch: exercises the pad-free boundary-clipped block.
    x2 = jax.random.normal(kx2, (13, n_input), jnp.float32)
    y2 = jax.block_until_ready(forward(x2))
    y2_ref = reference_forward(x2, params)
    assert y2.shape == (13, n_output), y2.shape
    assert jnp.allclose(y2, y2_ref, atol=1e-5, rtol=1e-5), (y2, y2_ref)

    print("KERNEL_OK")
</pallas_src>

<mosaic_0001>
module attributes {stable_mosaic.version = 11 : i64} {
  func.func @_affine_bias_smem_kernel(%arg0: i32, %arg1: memref<8x5xf32, #tpu.memory_space<vmem>>, %arg2: memref<5x1xf32, #tpu.memory_space<vmem>>, %arg3: memref<1xf32, #tpu.memory_space<smem>>, %arg4: memref<8x1xf32, #tpu.memory_space<vmem>>) attributes {dimension_semantics = [#tpu.dimension_semantics<parallel>], iteration_bounds = array<i64: 1>, scalar_prefetch = 0 : i64, scratch_operands = 0 : i64, tpu.core_type = #tpu.core_type<tc>, window_params = [{transform_indices = @transform_0, window_bounds = array<i64: 8, 5>}, {pipeline_mode = #tpu.pipeline_mode<synchronous>, transform_indices = @transform_1, window_bounds = array<i64: 5, 1>}, {transform_indices = @transform_2, window_bounds = array<i64: 1>}, {transform_indices = @transform_3, window_bounds = array<i64: 8, 1>}]} {
    %c0 = arith.constant 0 : index
    %c0_0 = arith.constant 0 : index
    %0 = vector.load %arg1[%c0, %c0_0] : memref<8x5xf32, #tpu.memory_space<vmem>>, vector<8x5xf32>
    %c0_1 = arith.constant 0 : index
    %c0_2 = arith.constant 0 : index
    %1 = vector.load %arg2[%c0_1, %c0_2] : memref<5x1xf32, #tpu.memory_space<vmem>>, vector<5x1xf32>
    %cst = arith.constant dense<0.000000e+00> : vector<8x1xf32>
    %2 = tpu.matmul %0, %1, %cst {dimension_numbers = #tpu.dot_dimension_numbers<[1], [0], [0], [1], [0, 0, 1, 1], [], []>} : vector<8x5xf32>, vector<5x1xf32>, vector<8x1xf32> -> vector<8x1xf32>
    %c0_3 = arith.constant 0 : index
    %3 = memref.load %arg3[%c0_3] : memref<1xf32, #tpu.memory_space<smem>>
    %4 = vector.broadcast %3 : f32 to vector<8x1xf32>
    %5 = arith.addf %2, %4 : vector<8x1xf32>
    %c0_4 = arith.constant 0 : index
    %c0_5 = arith.constant 0 : index
    %6 = vector.load %arg4[%c0_4, %c0_5] : memref<8x1xf32, #tpu.memory_space<vmem>>, vector<8x1xf32>
    tpu.vector_store %arg4[%c0_4, %c0_5], %5 {strides = array<i32>} : memref<8x1xf32, #tpu.memory_space<vmem>>, vector<8x1xf32>,
    return
  }
  func.func @transform_0(%arg0: i32) -> (i32, i32) {
    %c0_i32 = arith.constant 0 : i32
    %c0_i32_0 = arith.constant 0 : i32
    return %arg0, %c0_i32 : i32, i32
  }
  func.func @transform_1(%arg0: i32) -> (i32, i32) {
    %c0_i32 = arith.constant 0 : i32
    %c0_i32_0 = arith.constant 0 : i32
    %c0_i32_1 = arith.constant 0 : i32
    return %c0_i32, %c0_i32_0 : i32, i32
  }
  func.func @transform_2(%arg0: i32) -> i32 {
    %c0_i32 = arith.constant 0 : i32
    %c0_i32_0 = arith.constant 0 : i32
    return %c0_i32 : i32
  }
  func.func @transform_3(%arg0: i32) -> (i32, i32) {
    %c0_i32 = arith.constant 0 : i32
    %c0_i32_0 = arith.constant 0 : i32
    return %arg0, %c0_i32 : i32, i32
  }
}

</mosaic_0001>

<llo_original>
// kernel: forward.1
$region0: #{forward.1}
  #allocation0 [shape = 'u32[]', space=smem, size = 0x4, offset = 0x4, fixed_abs, tag = 'smem constant byte address 0x4 - core index']
  #allocation1 [shape = 'u32[144,128]{1,0:T(1,128)}', space=vmem, size = 0x12000, scoped, tag = 'internal scratch']
  #allocation2 [shape = 'f32[1]{0:T(128)S(6)}', space=smem, size = 0x200, scoped, tag = 'scoped memory for forward.1']
  %s0 = inlined_call_operand.hbm [shape: f32[8,5], index: 0, kind: input, shape index: {}]
  %s1 = inlined_call_operand.hbm [shape: f32[5,1], index: 1, kind: input, shape index: {}]
  %s2 = inlined_call_operand.<no memory space> [shape: f32[1], index: 2, kind: input, shape index: {}]
  %s3 = inlined_call_operand.vmem [shape: f32[8,1], index: 3, kind: output, shape index: {}]
  %s4 = sld [smem:[#allocation0]]
  $region30: #{forward.1} parent=0
    _
  %s6 = ssub.s32 1, %s4
  %s7 = scalar_select 0, %s6, %s4
  %8 = sst [smem:[#allocation2]] %s2
  $region1: #{forward.1} parent=0
    #allocation3 [shape = 'u8[4096]{0}', space=vmem, size = 0x1000, scoped, tag = 'input window, operand 0, single buffered']
    #allocation4 [shape = 's32[1]{0}', space=sflag, size = 0x4, scoped, tag = 'scoped memory for forward.1']
    #allocation5 [shape = 'u8[4096]{0}', space=vmem, size = 0x1000, scoped, tag = 'input window, operand 1, single buffered']
    #allocation6 [shape = 's32[1]{0}', space=sflag, size = 0x4, scoped, tag = 'scoped memory for forward.1']
    %9 = vsyncpa [#allocation4], 0
    %10 = vsyncpa [#allocation6], 0
    // Predicated region
    $region2: #{forward.1} parent=1 // pred_check
      _
    $region3: #{forward.1} parent=1 // pred_check_branch
      %12 = sbr.rel (0) target = $region5
    $region4: #{forward.1} parent=1 // pred_region
      %s14 = ssub.s32 128, 128
      %15 = vsyncadd [#allocation4], %s14
      %s17 = sshll.u32 [#allocation3], 4
      %s18 = int_to_ptr.vmem [resolvable:$true] %s17
      %20 = dma.hbm_to_vmem [thread:$0]  %s0, 128, %s18, [#allocation4]
    $region5: #{forward.1} parent=1 // pred_fallthru
      _
    // Predicated region
    $region6: #{forward.1} parent=1 // pred_check
      _
    $region7: #{forward.1} parent=1 // pred_check_branch
      %22 = sbr.rel (0) target = $region9
    $region8: #{forward.1} parent=1 // pred_region
      %s24 = ssub.s32 128, 128
      %25 = vsyncadd [#allocation6], %s24
      %s27 = sshll.u32 [#allocation5], 4
      %s28 = int_to_ptr.vmem [resolvable:$true] %s27
      %30 = dma.hbm_to_vmem [thread:$0]  %s1, 128, %s28, [#allocation6]
    $region9: #{forward.1} parent=1 // pred_fallthru
      _
    // Predicated region
    $region10: #{forward.1} parent=1 // pred_check
      _
    $region11: #{forward.1} parent=1 // pred_check_branch
      %32 = sbr.rel (0) target = $region13
    $region12: #{forward.1} parent=1 // pred_region
      _
    $region13: #{forward.1} parent=1 // pred_fallthru
      _
    // Predicated region
    $region14: #{forward.1} parent=1 // pred_check
      _
    $region15: #{forward.1} parent=1 // pred_check_branch
      %34 = sbr.rel (0) target = $region17
    $region16: #{forward.1} parent=1 // pred_region
      %35 = dma.done [#allocation4], 128
    $region17: #{forward.1} parent=1 // pred_fallthru
      _
    // Predicated region
    $region18: #{forward.1} parent=1 // pred_check
      _
    $region19: #{forward.1} parent=1 // pred_check_branch
      %37 = sbr.rel (0) target = $region21
    $region20: #{forward.1} parent=1 // pred_region
      %38 = dma.done [#allocation6], 128
    $region21: #{forward.1} parent=1 // pred_fallthru
      _
    %v39 = vld [vmem:[#allocation3] sm:$0xff]
    %v40 = vld [vmem:[#allocation5] sm:$0x1f]
    %s41 = sld [smem:[#allocation2]]
    %v42 = vstv %s41
    %vm43 = vcmask 39936
    %v45 = vsel %vm43, %v39, 0
    %vm47 = vcmask 1044480
    %v49 = vsel %vm47, %v40, 0
    %51 = vmatprep.subr.mxu0 0.0
    %52 = vmatpush1.msra.mxu0 %v49
    %53 = vmatprep.subr.mxu0 0.0
    %54 = vmatpush1.msra.mxu0 0.0
    %55 = vmatprep.subr.mxu0 0.0
    %56 = vmatpush1.msra.mxu0 0.0
    %57 = vmatprep.subr.mxu0 0.0
    %58 = vmatpush1.msra.mxu0 0.0
    %59 = vmatprep.subr.mxu0 0.0
    %60 = vmatpush1.msra.mxu0 0.0
    %61 = vmatprep.subr.mxu0 0.0
    %62 = vmatpush1.msra.mxu0 0.0
    %63 = vmatprep.subr.mxu0 0.0
    %64 = vmatpush1.msra.mxu0 0.0
    %65 = vmatprep.subr.mxu0 0.0
    %66 = vmatpush1.msra.mxu0 0.0
    %67 = vmatprep.subr.mxu0 0.0
    %68 = vmatpush1.msra.mxu0 0.0
    %69 = vmatprep.subr.mxu0 0.0
    %70 = vmatpush1.msra.mxu0 0.0
    %71 = vmatprep.subr.mxu0 0.0
    %72 = vmatpush1.msra.mxu0 0.0
    %73 = vmatprep.subr.mxu0 0.0
    %74 = vmatpush1.msra.mxu0 0.0
    %75 = vmatprep.subr.mxu0 0.0
    %76 = vmatpush1.msra.mxu0 0.0
    %77 = vmatprep.subr.mxu0 0.0
    %78 = vmatpush1.msra.mxu0 0.0
    %79 = vmatprep.subr.mxu0 0.0
    %80 = vmatpush1.msra.mxu0 0.0
    %81 = vmatprep.subr.mxu0 0.0
    %82 = vmatpush1.msra.mxu0 0.0
    %83 = vmatprep.subr.mxu0 0.0
    %84 = vmatpush1.msra.mxu0 0.0
    %85 = vmatprep.subr.mxu0 0.0
    %86 = vmatpush1.msra.mxu0 0.0
    %87 = vmatprep.subr.mxu0 0.0
    %88 = vmatpush1.msra.mxu0 0.0
    %89 = vmatprep.subr.mxu0 0.0
    %90 = vmatpush1.msra.mxu0 0.0
    %91 = vmatprep.subr.mxu0 0.0
    %92 = vmatpush1.msra.mxu0 0.0
    %93 = vmatprep.subr.mxu0 0.0
    %94 = vmatpush1.msra.mxu0 0.0
    %95 = vmatprep.subr.mxu0 0.0
    %96 = vmatpush1.msra.mxu0 0.0
    %97 = vmatprep.subr.mxu0 0.0
    %98 = vmatpush1.msra.mxu0 0.0
    %99 = vmatprep.subr.mxu0 0.0
    %100 = vmatpush1.msra.mxu0 0.0
    %101 = vmatprep.subr.mxu0 0.0
    %102 = vmatpush1.msra.mxu0 0.0
    %103 = vmatprep.subr.mxu0 0.0
    %104 = vmatpush1.msra.mxu0 0.0
    %105 = vmatprep.subr.mxu0 0.0
    %106 = vmatpush1.msra.mxu0 0.0
    %107 = vmatprep.subr.mxu0 0.0
    %108 = vmatpush1.msra.mxu0 0.0
    %109 = vmatprep.subr.mxu0 0.0
    %110 = vmatpush1.msra.mxu0 0.0
    %111 = vmatprep.subr.mxu0 0.0
    %112 = vmatpush1.msra.mxu0 0.0
    %113 = vmatprep.subr.mxu0 0.0
    %114 = vmatpush1.msra.mxu0 0.0
    %115 = vmatprep.mubr.f32.mxu0 0.0
    %116 = vmatmul.mubr.f32.gmra.mrb[0].mxu0 %v45
    %v117 = vpop.f32.mrb[0].mxu0
    %v118 = vadd.f32 %v42, %v117
    %v119 = vpop.f32.mrb[0].mxu0
    %120 = vdwg.mxu0
    %vm121 = vcmask 7168
    %122 = vst.msk [vmem:[%s3] sm:$0xff] %vm121, %v118
    // Predicated region
    $region22: #{forward.1} parent=1 // pred_check
      _
    $region23: #{forward.1} parent=1 // pred_check_branch
      %124 = sbr.rel (0) target = $region25
    $region24: #{forward.1} parent=1 // pred_region
      _
    $region25: #{forward.1} parent=1 // pred_fallthru
      _
    // Predicated region
    $region26: #{forward.1} parent=1 // pred_check
      _
    $region27: #{forward.1} parent=1 // pred_check_branch
      %126 = sbr.rel (0) target = $region29
    $region28: #{forward.1} parent=1 // pred_region
      _
    $region29: #{forward.1} parent=1 // pred_fallthru
      _
    %127 = vsyncpa [#allocation4], 1
    %128 = vsyncpa [#allocation6], 1

</llo_original>
